<compile_context>
chip_gen: v6e
topology: v6e:2x2x1
jax: 0.10.0
libtpu: 0.0.40
codegen_flags: <defaults>
</compile_context>

<pallas_src>
import math
from functools import lru_cache

import numpy as np
import jax
import jax.numpy as jnp
from jax.experimental import pallas as pl
from jax.experimental.pallas import tpu as pltpu


# ----------------------------------------------------------------------------
# Pallas kernel: nearest-neighbor resample of one (H, W) plane via two matmuls
# ----------------------------------------------------------------------------
def _nearest_kernel(x_ref, rh_ref, rw_ref, o_ref):
    """x_ref: (1, H, W)   rh_ref: (Ho, H)   rw_ref: (W, Wo)   o_ref: (1, Ho, Wo)

    rh[i, src_h(i)] = 1 and rw[src_w(j), j] = 1, so
        out = rh @ x @ rw  ==  x[src_h[:, None], src_w[None, :]]   (exactly).
    """
    x = x_ref[0].astype(jnp.float32)                                    # (H, W)
    y = jnp.dot(x, rw_ref[...], preferred_element_type=jnp.float32)     # (H, Wo)
    o = jnp.dot(rh_ref[...], y, preferred_element_type=jnp.float32)     # (Ho, Wo)
    o_ref[0] = o.astype(o_ref.dtype)


@lru_cache(maxsize=None)
def _get_nearest_call(nc, H, W, Ho, Wo, dtype):
    return pl.pallas_call(
        _nearest_kernel,
        out_shape=jax.ShapeDtypeStruct((nc, Ho, Wo), dtype),
        grid=(nc,),
        in_specs=[
            pl.BlockSpec((1, H, W), lambda i: (i, 0, 0)),
            pl.BlockSpec((Ho, H), lambda i: (0, 0)),   # resident: same block every step
            pl.BlockSpec((W, Wo), lambda i: (0, 0)),   # resident: same block every step
        ],
        out_specs=pl.BlockSpec((1, Ho, Wo), lambda i: (i, 0, 0)),
        compiler_params=pltpu.CompilerParams(
            dimension_semantics=("parallel",)),
    )


# ----------------------------------------------------------------------------
# Host-side helpers / wrapper
# ----------------------------------------------------------------------------
def _selection_matrices(H, W, sh, sw):
    """PyTorch 'nearest' semantics: out = floor(in * s), src = min(floor(dst / s), in-1)."""
    Ho = int(math.floor(H * sh))
    Wo = int(math.floor(W * sw))
    src_h = np.minimum(np.floor(np.arange(Ho) / sh).astype(np.int64), H - 1)
    src_w = np.minimum(np.floor(np.arange(Wo) / sw).astype(np.int64), W - 1)
    Rh = np.zeros((Ho, H), np.float32)
    Rh[np.arange(Ho), src_h] = 1.0
    Rw = np.zeros((W, Wo), np.float32)
    Rw[src_w, np.arange(Wo)] = 1.0
    return Rh, Rw, src_h, src_w


def interpolate_nearest(x_nchw, scale_factor):
    """Equivalent of Interpolate(scale_factor).forward(x) for NCHW float inputs."""
    if isinstance(scale_factor, (tuple, list)):
        sh, sw = float(scale_factor[0]), float(scale_factor[1])
    else:
        sh = sw = float(scale_factor)
    N, C, H, W = x_nchw.shape
    Rh, Rw, _, _ = _selection_matrices(H, W, sh, sw)
    Ho, Wo = Rh.shape[0], Rw.shape[1]
    call = _get_nearest_call(N * C, H, W, Ho, Wo, np.dtype(x_nchw.dtype))
    out = call(x_nchw.reshape(N * C, H, W), jnp.asarray(Rh), jnp.asarray(Rw))
    # (N*C, Ho, Wo) -> (N, C, Ho, Wo) is a free row-major reinterpretation.
    return out.reshape(N, C, Ho, Wo)


# ----------------------------------------------------------------------------
if __name__ == "__main__":
    N, C, H, W = 2, 4, 16, 16
    scale = 2

    x = jax.random.normal(jax.random.PRNGKey(0), (N, C, H, W), dtype=jnp.float32)

    y = interpolate_nearest(x, scale)
    y = jax.block_until_ready(y)

    # Pure-NumPy reference for F.interpolate(mode='nearest', scale_factor=scale)
    _, _, src_h, src_w = _selection_matrices(H, W, float(scale), float(scale))
    ref = np.asarray(x)[:, :, src_h][:, :, :, src_w]

    assert y.shape == (N, C, H * scale, W * scale), y.shape
    np.testing.assert_allclose(np.asarray(y), ref, rtol=1e-6, atol=1e-6)
    print("KERNEL_OK")
</pallas_src>

<mosaic_0001>
module attributes {stable_mosaic.version = 11 : i64} {
  func.func @_nearest_kernel(%arg0: i32, %arg1: memref<1x16x16xf32, #tpu.memory_space<vmem>>, %arg2: memref<32x16xf32, #tpu.memory_space<vmem>>, %arg3: memref<16x32xf32, #tpu.memory_space<vmem>>, %arg4: memref<1x32x32xf32, #tpu.memory_space<vmem>>) attributes {dimension_semantics = [#tpu.dimension_semantics<parallel>], iteration_bounds = array<i64: 8>, scalar_prefetch = 0 : i64, scratch_operands = 0 : i64, tpu.core_type = #tpu.core_type<tc>, window_params = [{transform_indices = @transform_0, window_bounds = array<i64: 1, 16, 16>}, {pipeline_mode = #tpu.pipeline_mode<synchronous>, transform_indices = @transform_1, window_bounds = array<i64: 32, 16>}, {pipeline_mode = #tpu.pipeline_mode<synchronous>, transform_indices = @transform_2, window_bounds = array<i64: 16, 32>}, {transform_indices = @transform_3, window_bounds = array<i64: 1, 32, 32>}]} {
    %c0 = arith.constant 0 : index
    %c0_0 = arith.constant 0 : index
    %c0_1 = arith.constant 0 : index
    %0 = vector.load %arg1[%c0, %c0_0, %c0_1] : memref<1x16x16xf32, #tpu.memory_space<vmem>>, vector<1x16x16xf32>
    %1 = vector.shape_cast %0 : vector<1x16x16xf32> to vector<16x16xf32>
    %c0_2 = arith.constant 0 : index
    %c0_3 = arith.constant 0 : index
    %2 = vector.load %arg3[%c0_2, %c0_3] : memref<16x32xf32, #tpu.memory_space<vmem>>, vector<16x32xf32>
    %cst = arith.constant dense<0.000000e+00> : vector<16x32xf32>
    %3 = tpu.matmul %1, %2, %cst {dimension_numbers = #tpu.dot_dimension_numbers<[1], [0], [0], [1], [0, 0, 1, 1], [], []>} : vector<16x16xf32>, vector<16x32xf32>, vector<16x32xf32> -> vector<16x32xf32>
    %c0_4 = arith.constant 0 : index
    %c0_5 = arith.constant 0 : index
    %4 = vector.load %arg2[%c0_4, %c0_5] : memref<32x16xf32, #tpu.memory_space<vmem>>, vector<32x16xf32>
    %cst_6 = arith.constant dense<0.000000e+00> : vector<32x32xf32>
    %5 = tpu.matmul %4, %3, %cst_6 {dimension_numbers = #tpu.dot_dimension_numbers<[1], [0], [0], [1], [0, 0, 1, 1], [], []>} : vector<32x16xf32>, vector<16x32xf32>, vector<32x32xf32> -> vector<32x32xf32>
    %c0_7 = arith.constant 0 : index
    %c0_8 = arith.constant 0 : index
    %c0_9 = arith.constant 0 : index
    %6 = vector.load %arg4[%c0_7, %c0_8, %c0_9] : memref<1x32x32xf32, #tpu.memory_space<vmem>>, vector<1x32x32xf32>
    %7 = vector.shape_cast %6 : vector<1x32x32xf32> to vector<32x32xf32>
    %8 = vector.shape_cast %5 : vector<32x32xf32> to vector<1x32x32xf32>
    tpu.vector_store %arg4[%c0_7, %c0_8, %c0_9], %8 {strides = array<i32>} : memref<1x32x32xf32, #tpu.memory_space<vmem>>, vector<1x32x32xf32>,
    return
  }
  func.func @transform_0(%arg0: i32) -> (i32, i32, i32) {
    %c0_i32 = arith.constant 0 : i32
    %c0_i32_0 = arith.constant 0 : i32
    %c0_i32_1 = arith.constant 0 : i32
    return %arg0, %c0_i32, %c0_i32_0 : i32, i32, i32
  }
  func.func @transform_1(%arg0: i32) -> (i32, i32) {
    %c0_i32 = arith.constant 0 : i32
    %c0_i32_0 = arith.constant 0 : i32
    %c0_i32_1 = arith.constant 0 : i32
    return %c0_i32, %c0_i32_0 : i32, i32
  }
  func.func @transform_2(%arg0: i32) -> (i32, i32) {
    %c0_i32 = arith.constant 0 : i32
    %c0_i32_0 = arith.constant 0 : i32
    %c0_i32_1 = arith.constant 0 : i32
    return %c0_i32, %c0_i32_0 : i32, i32
  }
  func.func @transform_3(%arg0: i32) -> (i32, i32, i32) {
    %c0_i32 = arith.constant 0 : i32
    %c0_i32_0 = arith.constant 0 : i32
    %c0_i32_1 = arith.constant 0 : i32
    return %arg0, %c0_i32, %c0_i32_0 : i32, i32, i32
  }
}

</mosaic_0001>

<llo_original>
// kernel: tpu_custom_call.1
$region0: #{tpu_custom_call.1}
  #allocation0 [shape = 'u32[]', space=smem, size = 0x4, offset = 0x4, fixed_abs, tag = 'smem constant byte address 0x4 - core index']
  #allocation1 [shape = 'u32[144,128]{1,0:T(1,128)}', space=vmem, size = 0x12000, scoped, tag = 'internal scratch']
  %s0 = inlined_call_operand.hbm [shape: f32[8,16,16], index: 0, kind: input, shape index: {}]
  %s1 = inlined_call_operand.vmem [shape: f32[32,16], index: 1, kind: input, shape index: {}]
  %s2 = inlined_call_operand.vmem [shape: f32[16,32], index: 2, kind: input, shape index: {}]
  %s3 = inlined_call_operand.hbm [shape: f32[8,32,32], index: 3, kind: output, shape index: {}]
  %s4 = sld [smem:[#allocation0]]
  $region49: #{tpu_custom_call.1} parent=0
    _
  %s6 = ssub.s32 1, %s4
  %s7 = scalar_select 0, %s6, %s4
  $region1: #{tpu_custom_call.1} parent=0
    #allocation2 [shape = 'u8[16384]{0}', space=vmem, size = 0x4000, scoped, tag = 'input window, operand 0']
    #allocation3 [shape = 's32[2]{0}', space=sflag, size = 0x8, scoped, tag = 'scoped memory for tpu_custom_call.1']
    #allocation4 [shape = 's32[2]{0}', space=sflag, size = 0x8, scoped, tag = 'scoped memory for tpu_custom_call.1']
    #allocation5 [shape = 'u8[32768]{0}', space=vmem, size = 0x8000, scoped, tag = 'output window, operand 0']
    %8 = vsyncpa [#allocation3], 0
    %s9 = scalar_lea.sflag [#allocation3], 1
    %10 = vsyncpa %s9, 0
    %11 = vsyncpa [#allocation4], 0
    %s12 = scalar_lea.sflag [#allocation4], 1
    %13 = vsyncpa %s12, 0
    loop: start=0, step=1, limit=10
    $region2: #{tpu_custom_call.1} parent=1 // loop_pre_header
      _
    $region3: #{tpu_custom_call.1} parent=1 // loop_header
      %s15 = sphi 0, %s19
      %p16 = scmp.ge.s32.totalorder %s15, 10
      %s25 = sphi 0, %s27
      %s28 = sphi 0, %s25
      %s29 = sphi 0, %s28
      %s45 = sphi 0, %s29
      %s49 = sphi 0, %s49
      %s51 = sphi 0, %s49
      %s52 = sphi 0, %s51
      %s66 = sphi 0, %s52
      %s70 = sphi 0, %s70
      %s72 = sphi 0, %s70
      %s73 = sphi 0, %s72
      %s87 = sphi 0, %s73
      %s93 = sphi 0, %s95
      %s96 = sphi 0, %s93
      %s97 = sphi 0, %s96
      %s113 = sphi 0, %s97
    $region4: #{tpu_custom_call.1} parent=1 // loop_header_branch
      %18 = sbr.rel (%p16) target = $region8
    $region5: #{tpu_custom_call.1} parent=1 // loop_body
      %s20 = ssub.s32 %s15, 1
      %s21 = ssub.s32 %s15, 2
      %s22 = sadd.s32 %s15, 1
      %s23 = ssub.s32 %s15, %s22
      %p24 = scmp.eq.s32.totalorder %s23, 0
      %s26 = sadd.s32 %s25, 1
      %s27 = scalar_select %p24, %s25, %s26
      %p30 = pneg %p24
      %p31 = scmp.eq.s32.totalorder %s15, 7
      %p32 = por %p30, %p31
      %p33 = scmp.ne.s32.totalorder %s25, %s28
      %p34 = scmp.eq.s32.totalorder %s15, 0
      %p35 = por %p33, %p34
      %p36 = scmp.ne.s32.totalorder %s25, %s28
      %p37 = scmp.eq.s32.totalorder %s20, 7
      %p38 = por %p36, %p37
      %p39 = scmp.ne.s32.totalorder %s28, %s29
      %p40 = scmp.eq.s32.totalorder %s20, 0
      %p41 = por %p39, %p40
      %p42 = scmp.ne.s32.totalorder %s28, %s29
      %p43 = scmp.eq.s32.totalorder %s21, 7
      %p44 = por %p42, %p43
      %p46 = scmp.ne.s32.totalorder %s29, %s45
      %p47 = scmp.eq.s32.totalorder %s21, 0
      %p48 = por %p46, %p47
      %s50 = sadd.s32 %s49, 1
      %p53 = scmp.eq.s32.totalorder %s15, 7
      %p54 = scmp.ne.s32.totalorder %s49, %s51
      %p55 = scmp.eq.s32.totalorder %s15, 0
      %p56 = por %p54, %p55
      %p57 = scmp.ne.s32.totalorder %s49, %s51
      %p58 = scmp.eq.s32.totalorder %s20, 7
      %p59 = por %p57, %p58
      %p60 = scmp.ne.s32.totalorder %s51, %s52
      %p61 = scmp.eq.s32.totalorder %s20, 0
      %p62 = por %p60, %p61
      %p63 = scmp.ne.s32.totalorder %s51, %s52
      %p64 = scmp.eq.s32.totalorder %s21, 7
      %p65 = por %p63, %p64
      %p67 = scmp.ne.s32.totalorder %s52, %s66
      %p68 = scmp.eq.s32.totalorder %s21, 0
      %p69 = por %p67, %p68
      %s71 = sadd.s32 %s70, 1
      %p74 = scmp.eq.s32.totalorder %s15, 7
      %p75 = scmp.ne.s32.totalorder %s70, %s72
      %p76 = scmp.eq.s32.totalorder %s15, 0
      %p77 = por %p75, %p76
      %p78 = scmp.ne.s32.totalorder %s70, %s72
      %p79 = scmp.eq.s32.totalorder %s20, 7
      %p80 = por %p78, %p79
      %p81 = scmp.ne.s32.totalorder %s72, %s73
      %p82 = scmp.eq.s32.totalorder %s20, 0
      %p83 = por %p81, %p82
      %p84 = scmp.ne.s32.totalorder %s72, %s73
      %p85 = scmp.eq.s32.totalorder %s21, 7
      %p86 = por %p84, %p85
      %p88 = scmp.ne.s32.totalorder %s73, %s87
      %p89 = scmp.eq.s32.totalorder %s21, 0
      %p90 = por %p88, %p89
      %s91 = ssub.s32 %s15, %s22
      %p92 = scmp.eq.s32.totalorder %s91, 0
      %s94 = sadd.s32 %s93, 1
      %s95 = scalar_select %p92, %s93, %s94
      %p98 = pneg %p92
      %p99 = scmp.eq.s32.totalorder %s15, 7
      %p100 = por %p98, %p99
      %p101 = scmp.ne.s32.totalorder %s93, %s96
      %p102 = scmp.eq.s32.totalorder %s15, 0
      %p103 = por %p101, %p102
      %p104 = scmp.ne.s32.totalorder %s93, %s96
      %p105 = scmp.eq.s32.totalorder %s20, 7
      %p106 = por %p104, %p105
      %p107 = scmp.ne.s32.totalorder %s96, %s97
      %p108 = scmp.eq.s32.totalorder %s20, 0
      %p109 = por %p107, %p108
      %p110 = scmp.ne.s32.totalorder %s96, %s97
      %p111 = scmp.eq.s32.totalorder %s21, 7
      %p112 = por %p110, %p111
      %p114 = scmp.ne.s32.totalorder %s97, %s113
      %p115 = scmp.eq.s32.totalorder %s21, 0
      %p116 = por %p114, %p115
      %p117 = scmp.le.s32.totalorder 1, %s15
      %p118 = scmp.lt.s32.totalorder %s15, 9
      %p119 = pnand %p117, %p118
      %p120 = pneg %p119
      // Predicated region
      $region9: #{tpu_custom_call.1} parent=5 // pred_check
        _
      $region10: #{tpu_custom_call.1} parent=5 // pred_check_branch
        %122 = sbr.rel (%p119) target = $region12
      $region11: #{tpu_custom_call.1} parent=5 // pred_region
        %s123 = ssub.s32 %s15, 1
        // Predicated region
        $region13: #{tpu_custom_call.1} parent=11 // pred_check
          %p124 = pneg %p62
        $region14: #{tpu_custom_call.1} parent=11 // pred_check_branch
          %126 = sbr.rel (%p124) target = $region16
        $region15: #{tpu_custom_call.1} parent=11 // pred_region
          _
        $region16: #{tpu_custom_call.1} parent=11 // pred_fallthru
          _
        // Predicated region
        $region17: #{tpu_custom_call.1} parent=11 // pred_check
          %p127 = pneg %p83
        $region18: #{tpu_custom_call.1} parent=11 // pred_check_branch
          %129 = sbr.rel (%p127) target = $region20
        $region19: #{tpu_custom_call.1} parent=11 // pred_region
          _
        $region20: #{tpu_custom_call.1} parent=11 // pred_fallthru
          _
      $region12: #{tpu_custom_call.1} parent=5 // pred_fallthru
        _
      %p130 = scmp.lt.s32.totalorder %s15, 8
      // Predicated region
      $region21: #{tpu_custom_call.1} parent=5 // pred_check
        %p131 = pneg %p130
      $region22: #{tpu_custom_call.1} parent=5 // pred_check_branch
        %133 = sbr.rel (%p131) target = $region24
      $region23: #{tpu_custom_call.1} parent=5 // pred_region
        // Predicated region
        $region25: #{tpu_custom_call.1} parent=23 // pred_check
          %p134 = pneg %p35
        $region26: #{tpu_custom_call.1} parent=23 // pred_check_branch
          %136 = sbr.rel (%p134) target = $region28
        $region27: #{tpu_custom_call.1} parent=23 // pred_region
          %s137 = sand.u32 %s25, 1
          %s138 = scalar_lea.sflag [#allocation3], %s137
          %s139 = sand.u32 %s25, 1
          %s140 = smul.addr %s139, 16
          %s141 = scalar_lea.vmem [#allocation2], %s140
          %s143 = ssub.s32 256, 256
          %144 = vsyncadd %s138, %s143
          %s145 = smul.addr %s15, 2
          %s146 = smul.addr %s145, 128
          %s147 = scalar_lea.hbm %s0, %s146
          %s148 = sshll.u32 %s141, 4
          %s149 = int_to_ptr.vmem [resolvable:$true] %s148
          %154 = dma.hbm_to_vmem [thread:$0]  %s147, 256, %s149, %s138, 128, 128, 8
        $region28: #{tpu_custom_call.1} parent=23 // pred_fallthru
          _
      $region24: #{tpu_custom_call.1} parent=5 // pred_fallthru
        _
      %p155 = scmp.le.s32.totalorder 1, %s15
      %p156 = scmp.lt.s32.totalorder %s15, 9
      %p157 = pnand %p155, %p156
      %p158 = pneg %p157
      // Predicated region
      $region29: #{tpu_custom_call.1} parent=5 // pred_check
        _
      $region30: #{tpu_custom_call.1} parent=5 // pred_check_branch
        %160 = sbr.rel (%p157) target = $region32
      $region31: #{tpu_custom_call.1} parent=5 // pred_region
        %s161 = ssub.s32 %s15, 1
        %s162 = sand.u32 %s28, 1
        %s163 = scalar_lea.sflag [#allocation3], %s162
        %s164 = sand.u32 %s28, 1
        %s165 = smul.addr %s164, 16
        %s166 = scalar_lea.vmem [#allocation2], %s165
        // Predicated region
        $region33: #{tpu_custom_call.1} parent=31 // pred_check
          %p167 = pneg %p41
        $region34: #{tpu_custom_call.1} parent=31 // pred_check_branch
          %169 = sbr.rel (%p167) target = $region36
        $region35: #{tpu_custom_call.1} parent=31 // pred_region
          %170 = dma.done %s163, 256
        $region36: #{tpu_custom_call.1} parent=31 // pred_fallthru
          _
        %s171 = sand.u32 %s28, 1
        %s172 = scalar_lea.sflag [#allocation3], %s171
        %s173 = sand.u32 %s28, 1
        %s174 = smul.addr %s173, 16
        %s175 = scalar_lea.vmem [#allocation2], %s174
        %p176 = pneg %p41
        %p177 = pneg %p38
        %p178 = pneg %p62
        %p179 = pneg %p59
        %p180 = pneg %p83
        %p181 = pneg %p80
        %p182 = pneg %p109
        %p183 = pneg %p106
        %s184 = sand.u32 %s96, 1
        %s185 = scalar_lea.sflag [#allocation4], %s184
        %s186 = sand.u32 %s96, 1
        %s187 = smul.addr %s186, 32
        %s188 = scalar_lea.vmem [#allocation5], %s187
        %v189 = vld [vmem:[%s166] sm:$0xff]
        %v190 = vld [vmem:[%s166 + $0x8] sm:$0xff]
        %v191 = vld [vmem:[%s2] sm:$0xff]
        %v192 = vld [vmem:[%s2 + $0x8] sm:$0xff]
        %vm193 = vcmask 130048
        %v195 = vsel %vm193, %v189, 0
        %v198 = vsel %vm193, %v190, 0
        %200 = vmatprep.subr.mxu0 0.0
        %201 = vmatpush1.msra.mxu0 0.0
        %202 = vmatprep.subr.mxu0 0.0
        %203 = vmatpush1.msra.mxu0 0.0
        %204 = vmatprep.subr.mxu0 0.0
        %205 = vmatpush1.msra.mxu0 0.0
        %206 = vmatprep.subr.mxu0 0.0
        %207 = vmatpush1.msra.mxu0 0.0
        %208 = vmatprep.subr.mxu0 0.0
        %209 = vmatpush1.msra.mxu0 0.0
        %210 = vmatprep.subr.mxu0 0.0
        %211 = vmatpush1.msra.mxu0 0.0
        %212 = vmatprep.subr.mxu0 0.0
        %213 = vmatpush1.msra.mxu0 0.0
        %214 = vmatprep.subr.mxu0 0.0
        %215 = vmatpush1.msra.mxu0 0.0
        %216 = vmatprep.subr.mxu0 0.0
        %217 = vmatpush1.msra.mxu0 0.0
        %218 = vmatprep.subr.mxu0 0.0
        %219 = vmatpush1.msra.mxu0 0.0
        %220 = vmatprep.subr.mxu0 0.0
        %221 = vmatpush1.msra.mxu0 0.0
        %222 = vmatprep.subr.mxu0 0.0
        %223 = vmatpush1.msra.mxu0 0.0
        %224 = vmatprep.subr.mxu0 0.0
        %225 = vmatpush1.msra.mxu0 0.0
        %226 = vmatprep.subr.mxu0 0.0
        %227 = vmatpush1.msra.mxu0 0.0
        %228 = vmatprep.subr.mxu0 0.0
        %229 = vmatpush1.msra.mxu0 %v192
        %230 = vmatprep.subr.mxu0 0.0
        %231 = vmatpush1.msra.mxu0 %v191
        %232 = vmatprep.subr.mxu0 0.0
        %233 = vmatpush2.msra.mxu0 0.0
        %234 = vmatprep.subr.mxu0 0.0
        %235 = vmatpush2.msra.mxu0 0.0
        %236 = vmatprep.subr.mxu0 0.0
        %237 = vmatpush2.msra.mxu0 0.0
        %238 = vmatprep.subr.mxu0 0.0
        %239 = vmatpush2.msra.mxu0 0.0
        %240 = vmatprep.subr.mxu0 0.0
        %241 = vmatpush2.msra.mxu0 0.0
        %242 = vmatprep.subr.mxu0 0.0
        %243 = vmatpush2.msra.mxu0 0.0
        %244 = vmatprep.subr.mxu0 0.0
        %245 = vmatpush2.msra.mxu0 0.0
        %246 = vmatprep.subr.mxu0 0.0
        %247 = vmatpush2.msra.mxu0 0.0
        %248 = vmatprep.subr.mxu0 0.0
        %249 = vmatpush2.msra.mxu0 0.0
        %250 = vmatprep.subr.mxu0 0.0
        %251 = vmatpush2.msra.mxu0 0.0
        %252 = vmatprep.subr.mxu0 0.0
        %253 = vmatpush2.msra.mxu0 0.0
        %254 = vmatprep.subr.mxu0 0.0
        %255 = vmatpush2.msra.mxu0 0.0
        %256 = vmatprep.subr.mxu0 0.0
        %257 = vmatpush2.msra.mxu0 0.0
        %258 = vmatprep.subr.mxu0 0.0
        %259 = vmatpush2.msra.mxu0 0.0
        %260 = vmatprep.subr.mxu0 0.0
        %261 = vmatpush2.msra.mxu0 0.0
        %262 = vmatprep.subr.mxu0 0.0
        %263 = vmatpush2.msra.mxu0 0.0
        %264 = vmatprep.mubr.f32.mxu0 0.0
        %265 = vmatmul.mubr.f32.gmra.mxu0 %v195
        %v266 = vpop.f32.mrf.mxu0
        %v267 = vadd.f32 0.0, %v266
        %v268 = vpop.f32.mrf.mxu0
        %269 = vmatprep.mubr.f32.mxu0 0.0
        %270 = vmatmul.mubr.f32.gmra.mxu0 %v198
        %v271 = vpop.f32.mrf.mxu0
        %v272 = vadd.f32 0.0, %v271
        %v273 = vpop.f32.mrf.mxu0
        %274 = vdwg.mxu0
        %v275 = vld [vmem:[%s1] sm:$0xff]
        %v276 = vld [vmem:[%s1 + $0x8] sm:$0xff]
        %v277 = vld [vmem:[%s1 + $0x10] sm:$0xff]
        %v278 = vld [vmem:[%s1 + $0x18] sm:$0xff]
        %v280 = vsel %vm193, %v275, 0
        %v283 = vsel %vm193, %v276, 0
        %v286 = vsel %vm193, %v277, 0
        %v289 = vsel %vm193, %v278, 0
        %291 = vmatprep.subr.mxu0 0.0
        %292 = vmatpush1.msra.mxu0 0.0
        %293 = vmatprep.subr.mxu0 0.0
        %294 = vmatpush1.msra.mxu0 0.0
        %295 = vmatprep.subr.mxu0 0.0
        %296 = vmatpush1.msra.mxu0 0.0
        %297 = vmatprep.subr.mxu0 0.0
        %298 = vmatpush1.msra.mxu0 0.0
        %299 = vmatprep.subr.mxu0 0.0
        %300 = vmatpush1.msra.mxu0 0.0
        %301 = vmatprep.subr.mxu0 0.0
        %302 = vmatpush1.msra.mxu0 0.0
        %303 = vmatprep.subr.mxu0 0.0
        %304 = vmatpush1.msra.mxu0 0.0
        %305 = vmatprep.subr.mxu0 0.0
        %306 = vmatpush1.msra.mxu0 0.0
        %307 = vmatprep.subr.mxu0 0.0
        %308 = vmatpush1.msra.mxu0 0.0
        %309 = vmatprep.subr.mxu0 0.0
        %310 = vmatpush1.msra.mxu0 0.0
        %311 = vmatprep.subr.mxu0 0.0
        %312 = vmatpush1.msra.mxu0 0.0
        %313 = vmatprep.subr.mxu0 0.0
        %314 = vmatpush1.msra.mxu0 0.0
        %315 = vmatprep.subr.mxu0 0.0
        %316 = vmatpush1.msra.mxu0 0.0
        %317 = vmatprep.subr.mxu0 0.0
        %318 = vmatpush1.msra.mxu0 0.0
        %319 = vmatprep.subr.mxu0 0.0
        %320 = vmatpush1.msra.mxu0 %v272
        %321 = vmatprep.subr.mxu0 0.0
        %322 = vmatpush1.msra.mxu0 %v267
        %323 = vmatprep.subr.mxu0 0.0
        %324 = vmatpush2.msra.mxu0 0.0
        %325 = vmatprep.subr.mxu0 0.0
        %326 = vmatpush2.msra.mxu0 0.0
        %327 = vmatprep.subr.mxu0 0.0
        %328 = vmatpush2.msra.mxu0 0.0
        %329 = vmatprep.subr.mxu0 0.0
        %330 = vmatpush2.msra.mxu0 0.0
        %331 = vmatprep.subr.mxu0 0.0
        %332 = vmatpush2.msra.mxu0 0.0
        %333 = vmatprep.subr.mxu0 0.0
        %334 = vmatpush2.msra.mxu0 0.0
        %335 = vmatprep.subr.mxu0 0.0
        %336 = vmatpush2.msra.mxu0 0.0
        %337 = vmatprep.subr.mxu0 0.0
        %338 = vmatpush2.msra.mxu0 0.0
        %339 = vmatprep.subr.mxu0 0.0
        %340 = vmatpush2.msra.mxu0 0.0
        %341 = vmatprep.subr.mxu0 0.0
        %342 = vmatpush2.msra.mxu0 0.0
        %343 = vmatprep.subr.mxu0 0.0
        %344 = vmatpush2.msra.mxu0 0.0
        %345 = vmatprep.subr.mxu0 0.0
        %346 = vmatpush2.msra.mxu0 0.0
        %347 = vmatprep.subr.mxu0 0.0
        %348 = vmatpush2.msra.mxu0 0.0
        %349 = vmatprep.subr.mxu0 0.0
        %350 = vmatpush2.msra.mxu0 0.0
        %351 = vmatprep.subr.mxu0 0.0
        %352 = vmatpush2.msra.mxu0 0.0
        %353 = vmatprep.subr.mxu0 0.0
        %354 = vmatpush2.msra.mxu0 0.0
        %355 = vmatprep.mubr.f32.mxu0 0.0
        %356 = vmatmul.mubr.f32.gmra.mxu0 %v280
        %v357 = vpop.f32.mrf.mxu0
        %v358 = vadd.f32 0.0, %v357
        %v359 = vpop.f32.mrf.mxu0
        %360 = vmatprep.mubr.f32.mxu0 0.0
        %361 = vmatmul.mubr.f32.gmra.mxu0 %v283
        %v362 = vpop.f32.mrf.mxu0
        %v363 = vadd.f32 0.0, %v362
        %v364 = vpop.f32.mrf.mxu0
        %365 = vmatprep.mubr.f32.mxu0 0.0
        %366 = vmatmul.mubr.f32.gmra.mxu0 %v286
        %v367 = vpop.f32.mrf.mxu0
        %v368 = vadd.f32 0.0, %v367
        %v369 = vpop.f32.mrf.mxu0
        %370 = vmatprep.mubr.f32.mxu0 0.0
        %371 = vmatmul.mubr.f32.gmra.mxu0 %v289
        %v372 = vpop.f32.mrf.mxu0
        %v373 = vadd.f32 0.0, %v372
        %v374 = vpop.f32.mrf.mxu0
        %375 = vdwg.mxu0
        %vm376 = vcmask 261120
        %377 = vst.msk [vmem:[%s188] sm:$0xff] %vm376, %v358
        %378 = vst.msk [vmem:[%s188 + $0x8] sm:$0xff] %vm376, %v363
        %379 = vst.msk [vmem:[%s188 + $0x10] sm:$0xff] %vm376, %v368
        %380 = vst.msk [vmem:[%s188 + $0x18] sm:$0xff] %vm376, %v373
        %s381 = sand.u32 %s96, 1
        %s382 = scalar_lea.sflag [#allocation4], %s381
        %s383 = sand.u32 %s96, 1
        %s384 = smul.addr %s383, 32
        %s385 = scalar_lea.vmem [#allocation5], %s384
        // Predicated region
        $region37: #{tpu_custom_call.1} parent=31 // pred_check
          %p386 = pneg %p106
        $region38: #{tpu_custom_call.1} parent=31 // pred_check_branch
          %388 = sbr.rel (%p386) target = $region40
        $region39: #{tpu_custom_call.1} parent=31 // pred_region
          %s390 = ssub.s32 512, 512
          %391 = vsyncadd %s382, %s390
          %s392 = smul.addr %s20, 4
          %s393 = smul.addr %s392, 128
          %s394 = scalar_lea.hbm %s3, %s393
          %s395 = sshll.u32 %s385, 4
          %s396 = int_to_ptr.vmem [resolvable:$true] %s395
          %401 = dma.vmem_to_hbm [thread:$0]  %s396, 512, %s394, %s382, 128, 128, 8
        $region40: #{tpu_custom_call.1} parent=31 // pred_fallthru
          _
      $region32: #{tpu_custom_call.1} parent=5 // pred_fallthru
        _
      %p402 = scmp.le.s32.totalorder 2, %s15
      // Predicated region
      $region41: #{tpu_custom_call.1} parent=5 // pred_check
        %p403 = pneg %p402
      $region42: #{tpu_custom_call.1} parent=5 // pred_check_branch
        %405 = sbr.rel (%p403) target = $region44
      $region43: #{tpu_custom_call.1} parent=5 // pred_region
        %s406 = ssub.s32 %s15, 2
        // Predicated region
        $region45: #{tpu_custom_call.1} parent=43 // pred_check
          %p407 = pneg %p112
        $region46: #{tpu_custom_call.1} parent=43 // pred_check_branch
          %409 = sbr.rel (%p407) target = $region48
        $region47: #{tpu_custom_call.1} parent=43 // pred_region
          %s410 = sand.u32 %s97, 1
          %s411 = scalar_lea.sflag [#allocation4], %s410
          %s412 = sand.u32 %s97, 1
          %s413 = smul.addr %s412, 32
          %s414 = scalar_lea.vmem [#allocation5], %s413
          %415 = dma.done %s411, 512
        $region48: #{tpu_custom_call.1} parent=43 // pred_fallthru
          _
      $region44: #{tpu_custom_call.1} parent=5 // pred_fallthru
        _
    $region6: #{tpu_custom_call.1} parent=1 // loop_footer
      %s19 = sadd.s32 1, %s15
    $region7: #{tpu_custom_call.1} parent=1 // loop_footer_branch
      %14 = sbr.rel target = $region3
    $region8: #{tpu_custom_call.1} parent=1 // loop_exit
      _
    %416 = vsyncpa [#allocation3], 1
    %s417 = scalar_lea.sflag [#allocation3], 1
    %418 = vsyncpa %s417, 1
    %419 = vsyncpa [#allocation4], 1
    %s420 = scalar_lea.sflag [#allocation4], 1
    %421 = vsyncpa %s420, 1

</llo_original>
